<compile_context>
chip_gen: v6e
topology: v6e:2x2x1
jax: 0.10.0
libtpu: 0.0.40
codegen_flags: <defaults>
</compile_context>

<pallas_src>
import math

import jax
import jax.numpy as jnp
from jax.experimental import pallas as pl
from jax.experimental.pallas import tpu as pltpu
import numpy as np


def _round_up(n, m):
    return ((n + m - 1) // m) * m


def _pca_transform_kernel(x_ref, w_ref, b_ref, o_ref):
    # x_ref: (tm, F*C)     packed input rows (compute dtype)
    # w_ref: (F*C, F*Kp)   block-diagonal components^T (resident, compute dtype)
    # b_ref: (1,  F*Kp)    replicated bias = mean @ comp^T (resident, f32)
    # o_ref: (tm, F*Kp)    packed projected output (f32)
    o_ref[...] = (
        jnp.dot(x_ref[...], w_ref[...], preferred_element_type=jnp.float32)
        - b_ref[...]
    )


def prepare_pca_projection(mean, components, *, compute_dtype=jnp.bfloat16):
    """One-time setup (hoisted out of the per-call forward path).

    Pads K up so the lane fold factor stays small: with C=32, K=20 the fold
    would force F=32 and a 97%-zero [1024, 640] weight; padding K to 32 gives
    F=4 and a dense [128, 128] weight while loads/stores stay lane-dense.
    """
    mean = jnp.asarray(mean, jnp.float32)
    components = jnp.asarray(components, jnp.float32)
    K, C = components.shape

    # Smallest F making F*C a multiple of 128, then pad K so F*K_pad is too.
    F = 128 // math.gcd(C, 128)
    K_pad = _round_up(K, 128 // F)
    CF, KF = F * C, F * K_pad

    comp_pad = jnp.zeros((K_pad, C), jnp.float32).at[:K].set(components)
    comp_t = comp_pad.T                                         # [C, K_pad]

    # Fold the mean into a bias: (x - mean) @ W^T == x @ W^T - mean @ W^T.
    bias = mean @ comp_t                                        # [K_pad]
    bias_big = jnp.tile(bias, F).reshape(1, KF)                 # [1, F*K_pad] f32

    # Block-diagonal weight: kron(I_F, comp_t) -> [F*C, F*K_pad] (dense 128x128
    # for the EEG shapes here).
    w_big = jnp.kron(jnp.eye(F, dtype=jnp.float32), comp_t).astype(compute_dtype)

    return {
        "w_big": w_big, "bias_big": bias_big,
        "F": F, "C": C, "K": K, "K_pad": K_pad,
        "compute_dtype": compute_dtype,
    }


def pca_transform(x, proj, *, tm=2048):
    """x: [T, C] -> [T, K] f32, using prepared projection operands `proj`."""
    x = x.astype(jnp.float32)
    T, C = x.shape
    assert C == proj["C"], (C, proj["C"])
    F, K, K_pad = proj["F"], proj["K"], proj["K_pad"]
    CF, KF = F * C, F * K_pad
    compute_dtype = proj["compute_dtype"]

    # ---- glue: lane-dense packing (free row-major reshape) ----------------
    T_r = _round_up(T, F)
    if T_r != T:
        # TODO(synk): this pad is a full HBM copy; for huge T with T % F != 0
        # handle the < F-row tail separately instead.
        x = jnp.pad(x, ((0, T_r - T), (0, 0)))
    rows = T_r // F
    x_packed = x.reshape(rows, CF).astype(compute_dtype)        # [T/F, F*C]

    # Row tiling: no padding of x to a multiple of tm — the ragged last block
    # is handled by the cdiv grid (masked output writes; rows are independent).
    tm = max(8, min(tm, _round_up(rows, 8)))
    grid = (pl.cdiv(rows, tm),)

    out_packed = pl.pallas_call(
        _pca_transform_kernel,
        out_shape=jax.ShapeDtypeStruct((rows, KF), jnp.float32),
        grid_spec=pltpu.PrefetchScalarGridSpec(
            num_scalar_prefetch=0,
            grid=grid,
            in_specs=[
                pl.BlockSpec((tm, CF), lambda i: (i, 0)),       # packed x tile
                pl.BlockSpec((CF, KF), lambda i: (0, 0)),       # W_big (resident)
                pl.BlockSpec((1, KF), lambda i: (0, 0)),        # bias  (resident)
            ],
            out_specs=pl.BlockSpec((tm, KF), lambda i: (i, 0)),
        ),
        compiler_params=pltpu.CompilerParams(
            dimension_semantics=("parallel",)),
    )(x_packed, proj["w_big"], proj["bias_big"])

    # ---- glue: unpack back to [T, K] (drop the zero-padded components) ----
    out = out_packed.reshape(T_r, K_pad)[:T, :K]
    return out


def fit_pca(samples, n_components):
    """Plain-JAX equivalent of PCA.fit (the module's `prepare`): returns
    (mean_, components_) from the concatenated random subset of the dataset.
    Note: n_components must be <= number of channels C."""
    C = samples.shape[1]
    assert n_components <= C, "PCA n_components cannot exceed channel count"
    mean = jnp.mean(samples, axis=0)                            # [C]
    xc = samples - mean[None, :]
    # components_ = top-K right singular vectors of the centered data.
    # TODO(synk): sklearn additionally applies svd_flip for a deterministic
    # sign convention; projections here may differ in sign per component.
    _, _, vt = jnp.linalg.svd(xc, full_matrices=False)
    components = vt[:n_components]                              # [K, C]
    return mean, components


if __name__ == "__main__":
    key = jax.random.PRNGKey(0)

    # Shapes consistent with an EEG [T, C] sample (C >= n_components).
    T = 128               # time steps in the sample passed to forward()
    C = 32                # EEG channels
    n_components = 20
    n_fit_samples = 256   # stand-in for the concatenated random subset

    k_fit, k_x = jax.random.split(key)

    # Deterministic synthetic "dataset" subset used by prepare()/fit.
    fit_data = jax.random.normal(k_fit, (n_fit_samples, C), dtype=jnp.float32)
    mean, components = fit_pca(fit_data, n_components)          # glue (setup)

    # Input to forward(): [T, C]
    x = jax.random.normal(k_x, (T, C), dtype=jnp.float32)

    # Plain-JAX reference of PCA.transform.
    ref = (x - mean[None, :]) @ components.T

    # Strict-precision path: f32 matmul inputs, f32 accumulation.
    proj_f32 = prepare_pca_projection(mean, components, compute_dtype=jnp.float32)
    out = jax.block_until_ready(pca_transform(x, proj_f32))
    assert out.shape == (T, n_components), out.shape
    np.testing.assert_allclose(np.asarray(out), np.asarray(ref),
                               rtol=1e-4, atol=1e-4)

    # Throughput path per review: bf16 matmul inputs (halves HBM read traffic,
    # native MXU rate), f32 accumulation; validated at a loosened tolerance.
    proj_bf16 = prepare_pca_projection(mean, components, compute_dtype=jnp.bfloat16)
    out_bf16 = jax.block_until_ready(pca_transform(x, proj_bf16))
    assert out_bf16.shape == (T, n_components), out_bf16.shape
    np.testing.assert_allclose(np.asarray(out_bf16), np.asarray(ref),
                               rtol=5e-2, atol=5e-2)

    print("KERNEL_OK")
</pallas_src>

<mosaic_0001>
module attributes {stable_mosaic.version = 11 : i64} {
  func.func @_pca_transform_kernel(%arg0: i32, %arg1: memref<32x128xf32, #tpu.memory_space<vmem>>, %arg2: memref<128x128xf32, #tpu.memory_space<vmem>>, %arg3: memref<1x128xf32, #tpu.memory_space<vmem>>, %arg4: memref<32x128xf32, #tpu.memory_space<vmem>>) attributes {dimension_semantics = [#tpu.dimension_semantics<parallel>], iteration_bounds = array<i64: 1>, scalar_prefetch = 0 : i64, scratch_operands = 0 : i64, tpu.core_type = #tpu.core_type<tc>, window_params = [{transform_indices = @transform_0, window_bounds = array<i64: 32, 128>}, {pipeline_mode = #tpu.pipeline_mode<synchronous>, transform_indices = @transform_1, window_bounds = array<i64: 128, 128>}, {pipeline_mode = #tpu.pipeline_mode<synchronous>, transform_indices = @transform_2, window_bounds = array<i64: 1, 128>}, {transform_indices = @transform_3, window_bounds = array<i64: 32, 128>}]} {
    %c0 = arith.constant 0 : index
    %c0_0 = arith.constant 0 : index
    %0 = vector.load %arg1[%c0, %c0_0] : memref<32x128xf32, #tpu.memory_space<vmem>>, vector<32x128xf32>
    %c0_1 = arith.constant 0 : index
    %c0_2 = arith.constant 0 : index
    %1 = vector.load %arg2[%c0_1, %c0_2] : memref<128x128xf32, #tpu.memory_space<vmem>>, vector<128x128xf32>
    %cst = arith.constant dense<0.000000e+00> : vector<32x128xf32>
    %2 = tpu.matmul %0, %1, %cst {dimension_numbers = #tpu.dot_dimension_numbers<[1], [0], [0], [1], [0, 0, 1, 1], [], []>} : vector<32x128xf32>, vector<128x128xf32>, vector<32x128xf32> -> vector<32x128xf32>
    %c0_3 = arith.constant 0 : index
    %c0_4 = arith.constant 0 : index
    %3 = vector.load %arg3[%c0_3, %c0_4] : memref<1x128xf32, #tpu.memory_space<vmem>>, vector<1x128xf32>
    %4 = vector.broadcast %3 : vector<1x128xf32> to vector<32x128xf32>
    %5 = arith.subf %2, %4 : vector<32x128xf32>
    %c0_5 = arith.constant 0 : index
    %c0_6 = arith.constant 0 : index
    %6 = vector.load %arg4[%c0_5, %c0_6] : memref<32x128xf32, #tpu.memory_space<vmem>>, vector<32x128xf32>
    tpu.vector_store %arg4[%c0_5, %c0_6], %5 {strides = array<i32>} : memref<32x128xf32, #tpu.memory_space<vmem>>, vector<32x128xf32>,
    return
  }
  func.func @transform_0(%arg0: i32) -> (i32, i32) {
    %c0_i32 = arith.constant 0 : i32
    %c0_i32_0 = arith.constant 0 : i32
    return %arg0, %c0_i32 : i32, i32
  }
  func.func @transform_1(%arg0: i32) -> (i32, i32) {
    %c0_i32 = arith.constant 0 : i32
    %c0_i32_0 = arith.constant 0 : i32
    %c0_i32_1 = arith.constant 0 : i32
    return %c0_i32, %c0_i32_0 : i32, i32
  }
  func.func @transform_2(%arg0: i32) -> (i32, i32) {
    %c0_i32 = arith.constant 0 : i32
    %c0_i32_0 = arith.constant 0 : i32
    %c0_i32_1 = arith.constant 0 : i32
    return %c0_i32, %c0_i32_0 : i32, i32
  }
  func.func @transform_3(%arg0: i32) -> (i32, i32) {
    %c0_i32 = arith.constant 0 : i32
    %c0_i32_0 = arith.constant 0 : i32
    return %arg0, %c0_i32 : i32, i32
  }
}

</mosaic_0001>

<llo_original>
// kernel: tpu_custom_call.1
$region0: #{tpu_custom_call.1}
  #allocation0 [shape = 'u32[]', space=smem, size = 0x4, offset = 0x4, fixed_abs, tag = 'smem constant byte address 0x4 - core index']
  #allocation1 [shape = 'u32[144,128]{1,0:T(1,128)}', space=vmem, size = 0x12000, scoped, tag = 'internal scratch']
  %s0 = inlined_call_operand.hbm [shape: f32[32,128], index: 0, kind: input, shape index: {}]
  %s1 = inlined_call_operand.hbm [shape: f32[128,128], index: 1, kind: input, shape index: {}]
  %s2 = inlined_call_operand.vmem [shape: f32[1,128], index: 2, kind: input, shape index: {}]
  %s3 = inlined_call_operand.hbm [shape: f32[32,128], index: 3, kind: output, shape index: {}]
  %s4 = sld [smem:[#allocation0]]
  $region30: #{tpu_custom_call.1} parent=0
    _
  %s6 = ssub.s32 1, %s4
  %s7 = scalar_select 0, %s6, %s4
  $region1: #{tpu_custom_call.1} parent=0
    #allocation2 [shape = 'u8[16384]{0}', space=vmem, size = 0x4000, scoped, tag = 'input window, operand 0, single buffered']
    #allocation3 [shape = 's32[1]{0}', space=sflag, size = 0x4, scoped, tag = 'scoped memory for tpu_custom_call.1']
    #allocation4 [shape = 's32[1]{0}', space=sflag, size = 0x4, scoped, tag = 'scoped memory for tpu_custom_call.1']
    #allocation5 [shape = 'u8[65536]{0}', space=vmem, size = 0x10000, scoped, tag = 'input window, operand 1, single buffered']
    #allocation6 [shape = 's32[1]{0}', space=sflag, size = 0x4, scoped, tag = 'scoped memory for tpu_custom_call.1']
    #allocation7 [shape = 'u8[16384]{0}', space=vmem, size = 0x4000, scoped, tag = 'output window, operand 0, single buffered']
    %8 = vsyncpa [#allocation3], 0
    %9 = vsyncpa [#allocation6], 0
    %10 = vsyncpa [#allocation4], 0
    // Predicated region
    $region2: #{tpu_custom_call.1} parent=1 // pred_check
      _
    $region3: #{tpu_custom_call.1} parent=1 // pred_check_branch
      %12 = sbr.rel (0) target = $region5
    $region4: #{tpu_custom_call.1} parent=1 // pred_region
      %s14 = ssub.s32 512, 512
      %15 = vsyncadd [#allocation3], %s14
      %s16 = sshll.u32 [#allocation2], 4
      %s17 = int_to_ptr.vmem [resolvable:$true] %s16
      %22 = dma.hbm_to_vmem [thread:$0]  %s0, 512, %s17, [#allocation3], 128, 128, 8
    $region5: #{tpu_custom_call.1} parent=1 // pred_fallthru
      _
    // Predicated region
    $region6: #{tpu_custom_call.1} parent=1 // pred_check
      _
    $region7: #{tpu_custom_call.1} parent=1 // pred_check_branch
      %24 = sbr.rel (0) target = $region9
    $region8: #{tpu_custom_call.1} parent=1 // pred_region
      %s26 = ssub.s32 2048, 2048
      %27 = vsyncadd [#allocation6], %s26
      %s28 = sshll.u32 [#allocation5], 4
      %s29 = int_to_ptr.vmem [resolvable:$true] %s28
      %34 = dma.hbm_to_vmem [thread:$0]  %s1, 2048, %s29, [#allocation6], 128, 128, 8
    $region9: #{tpu_custom_call.1} parent=1 // pred_fallthru
      _
    // Predicated region
    $region10: #{tpu_custom_call.1} parent=1 // pred_check
      _
    $region11: #{tpu_custom_call.1} parent=1 // pred_check_branch
      %36 = sbr.rel (0) target = $region13
    $region12: #{tpu_custom_call.1} parent=1 // pred_region
      _
    $region13: #{tpu_custom_call.1} parent=1 // pred_fallthru
      _
    // Predicated region
    $region14: #{tpu_custom_call.1} parent=1 // pred_check
      _
    $region15: #{tpu_custom_call.1} parent=1 // pred_check_branch
      %38 = sbr.rel (0) target = $region17
    $region16: #{tpu_custom_call.1} parent=1 // pred_region
      %39 = dma.done [#allocation3], 512
    $region17: #{tpu_custom_call.1} parent=1 // pred_fallthru
      _
    // Predicated region
    $region18: #{tpu_custom_call.1} parent=1 // pred_check
      _
    $region19: #{tpu_custom_call.1} parent=1 // pred_check_branch
      %41 = sbr.rel (0) target = $region21
    $region20: #{tpu_custom_call.1} parent=1 // pred_region
      %42 = dma.done [#allocation6], 2048
    $region21: #{tpu_custom_call.1} parent=1 // pred_fallthru
      _
    %v43 = vld [vmem:[#allocation2] sm:$0xff]
    %v44 = vld [vmem:[#allocation2 + $0x8] sm:$0xff]
    %v45 = vld [vmem:[#allocation2 + $0x10] sm:$0xff]
    %v46 = vld [vmem:[#allocation2 + $0x18] sm:$0xff]
    %v47 = vld [vmem:[#allocation5] sm:$0xff]
    %v48 = vld [vmem:[#allocation5 + $0x8] sm:$0xff]
    %v49 = vld [vmem:[#allocation5 + $0x10] sm:$0xff]
    %v50 = vld [vmem:[#allocation5 + $0x18] sm:$0xff]
    %v51 = vld [vmem:[#allocation5 + $0x20] sm:$0xff]
    %v52 = vld [vmem:[#allocation5 + $0x28] sm:$0xff]
    %v53 = vld [vmem:[#allocation5 + $0x30] sm:$0xff]
    %v54 = vld [vmem:[#allocation5 + $0x38] sm:$0xff]
    %v55 = vld [vmem:[#allocation5 + $0x40] sm:$0xff]
    %v56 = vld [vmem:[#allocation5 + $0x48] sm:$0xff]
    %v57 = vld [vmem:[#allocation5 + $0x50] sm:$0xff]
    %v58 = vld [vmem:[#allocation5 + $0x58] sm:$0xff]
    %v59 = vld [vmem:[#allocation5 + $0x60] sm:$0xff]
    %v60 = vld [vmem:[#allocation5 + $0x68] sm:$0xff]
    %v61 = vld [vmem:[#allocation5 + $0x70] sm:$0xff]
    %v62 = vld [vmem:[#allocation5 + $0x78] sm:$0xff]
    %63 = vmatprep.subr.mxu0 0.0
    %64 = vmatpush1.msra.mxu0 %v62
    %65 = vmatprep.subr.mxu0 0.0
    %66 = vmatpush1.msra.mxu0 %v61
    %67 = vmatprep.subr.mxu0 0.0
    %68 = vmatpush1.msra.mxu0 %v60
    %69 = vmatprep.subr.mxu0 0.0
    %70 = vmatpush1.msra.mxu0 %v59
    %71 = vmatprep.subr.mxu0 0.0
    %72 = vmatpush1.msra.mxu0 %v58
    %73 = vmatprep.subr.mxu0 0.0
    %74 = vmatpush1.msra.mxu0 %v57
    %75 = vmatprep.subr.mxu0 0.0
    %76 = vmatpush1.msra.mxu0 %v56
    %77 = vmatprep.subr.mxu0 0.0
    %78 = vmatpush1.msra.mxu0 %v55
    %79 = vmatprep.subr.mxu0 0.0
    %80 = vmatpush1.msra.mxu0 %v54
    %81 = vmatprep.subr.mxu0 0.0
    %82 = vmatpush1.msra.mxu0 %v53
    %83 = vmatprep.subr.mxu0 0.0
    %84 = vmatpush1.msra.mxu0 %v52
    %85 = vmatprep.subr.mxu0 0.0
    %86 = vmatpush1.msra.mxu0 %v51
    %87 = vmatprep.subr.mxu0 0.0
    %88 = vmatpush1.msra.mxu0 %v50
    %89 = vmatprep.subr.mxu0 0.0
    %90 = vmatpush1.msra.mxu0 %v49
    %91 = vmatprep.subr.mxu0 0.0
    %92 = vmatpush1.msra.mxu0 %v48
    %93 = vmatprep.subr.mxu0 0.0
    %94 = vmatpush1.msra.mxu0 %v47
    %95 = vmatprep.subr.mxu0 0.0
    %96 = vmatpush2.msra.mxu0 0.0
    %97 = vmatprep.subr.mxu0 0.0
    %98 = vmatpush2.msra.mxu0 0.0
    %99 = vmatprep.subr.mxu0 0.0
    %100 = vmatpush2.msra.mxu0 0.0
    %101 = vmatprep.subr.mxu0 0.0
    %102 = vmatpush2.msra.mxu0 0.0
    %103 = vmatprep.subr.mxu0 0.0
    %104 = vmatpush2.msra.mxu0 0.0
    %105 = vmatprep.subr.mxu0 0.0
    %106 = vmatpush2.msra.mxu0 0.0
    %107 = vmatprep.subr.mxu0 0.0
    %108 = vmatpush2.msra.mxu0 0.0
    %109 = vmatprep.subr.mxu0 0.0
    %110 = vmatpush2.msra.mxu0 0.0
    %111 = vmatprep.subr.mxu0 0.0
    %112 = vmatpush2.msra.mxu0 0.0
    %113 = vmatprep.subr.mxu0 0.0
    %114 = vmatpush2.msra.mxu0 0.0
    %115 = vmatprep.subr.mxu0 0.0
    %116 = vmatpush2.msra.mxu0 0.0
    %117 = vmatprep.subr.mxu0 0.0
    %118 = vmatpush2.msra.mxu0 0.0
    %119 = vmatprep.subr.mxu0 0.0
    %120 = vmatpush2.msra.mxu0 0.0
    %121 = vmatprep.subr.mxu0 0.0
    %122 = vmatpush2.msra.mxu0 0.0
    %123 = vmatprep.subr.mxu0 0.0
    %124 = vmatpush2.msra.mxu0 0.0
    %125 = vmatprep.subr.mxu0 0.0
    %126 = vmatpush2.msra.mxu0 0.0
    %127 = vmatprep.mubr.f32.mxu0 0.0
    %128 = vmatmul.mubr.f32.gmra.mxu0 %v43
    %v129 = vpop.f32.mrf.mxu0
    %v130 = vadd.f32 0.0, %v129
    %v131 = vpop.f32.mrf.mxu0
    %132 = vmatprep.mubr.f32.mxu0 0.0
    %133 = vmatmul.mubr.f32.gmra.mxu0 %v44
    %v134 = vpop.f32.mrf.mxu0
    %v135 = vadd.f32 0.0, %v134
    %v136 = vpop.f32.mrf.mxu0
    %137 = vmatprep.mubr.f32.mxu0 0.0
    %138 = vmatmul.mubr.f32.gmra.mxu0 %v45
    %v139 = vpop.f32.mrf.mxu0
    %v140 = vadd.f32 0.0, %v139
    %v141 = vpop.f32.mrf.mxu0
    %142 = vmatprep.mubr.f32.mxu0 0.0
    %143 = vmatmul.mubr.f32.gmra.mxu0 %v46
    %v144 = vpop.f32.mrf.mxu0
    %v145 = vadd.f32 0.0, %v144
    %v146 = vpop.f32.mrf.mxu0
    %147 = vdwg.mxu0
    %v148 = vld [vmem:[%s2] sm:$0x1]
    %v150 = vlaneseq
    %v151 = vshrl.u32 %v150, 7
    %v152 = vsub.s32 0, %v151
    %v153 = vrot.slane %v148, %v152
    %v155 = vsub.f32 %v130, %v153
    %v156 = vsub.f32 %v135, %v153
    %v157 = vsub.f32 %v140, %v153
    %v158 = vsub.f32 %v145, %v153
    %159 = vst [vmem:[#allocation7] sm:$0xff] %v155
    %160 = vst [vmem:[#allocation7 + $0x8] sm:$0xff] %v156
    %161 = vst [vmem:[#allocation7 + $0x10] sm:$0xff] %v157
    %162 = vst [vmem:[#allocation7 + $0x18] sm:$0xff] %v158
    // Predicated region
    $region22: #{tpu_custom_call.1} parent=1 // pred_check
      _
    $region23: #{tpu_custom_call.1} parent=1 // pred_check_branch
      %164 = sbr.rel (0) target = $region25
    $region24: #{tpu_custom_call.1} parent=1 // pred_region
      %s166 = ssub.s32 512, 512
      %167 = vsyncadd [#allocation4], %s166
      %s168 = sshll.u32 [#allocation7], 4
      %s169 = int_to_ptr.vmem [resolvable:$true] %s168
      %174 = dma.vmem_to_hbm [thread:$0]  %s169, 512, %s3, [#allocation4], 128, 128, 8
    $region25: #{tpu_custom_call.1} parent=1 // pred_fallthru
      _
    // Predicated region
    $region26: #{tpu_custom_call.1} parent=1 // pred_check
      _
    $region27: #{tpu_custom_call.1} parent=1 // pred_check_branch
      %176 = sbr.rel (0) target = $region29
    $region28: #{tpu_custom_call.1} parent=1 // pred_region
      %177 = dma.done [#allocation4], 512
    $region29: #{tpu_custom_call.1} parent=1 // pred_fallthru
      _
    %178 = vsyncpa [#allocation3], 1
    %179 = vsyncpa [#allocation6], 1
    %180 = vsyncpa [#allocation4], 1

</llo_original>
